<compile_context>
chip_gen: v7x
topology: tpu7x:2x2x1
jax: 0.10.0
libtpu: 0.0.40
codegen_flags: <defaults>
</compile_context>

<pallas_src>
import jax
import jax.numpy as jnp
from jax.experimental import pallas as pl
from jax.experimental.pallas import tpu as pltpu

_LANES = 128
_SUBLANES = 8
# 2 arrays x 2 buffers x 4 MiB block = 16 MiB of pipeline buffers; request a
# 32 MiB scoped-VMEM limit, which is valid on v5e/v6e (128 MiB physical) and
# v7x (64 MiB physical, 32 MiB default scoped).
_VMEM_LIMIT_BYTES = 32 * 1024 * 1024


def _logreg_kernel(x_ref, w_ref, b_ref, o_ref):
    # x_ref / o_ref: (tile_rows, 128) f32 in VMEM
    # w_ref, b_ref : (1,) f32 in SMEM (scalar-unit reads)
    w = w_ref[0]
    b = b_ref[0]
    z = x_ref[...] * w + b                 # VPU fused multiply-add
    o_ref[...] = jax.nn.sigmoid(z)         # exp on EUP, hidden under DMA


def logistic_regression_forward(x, w, b, *, max_tile_rows=8192):
    """x: (N, 1) f32, w: (1, 1) f32 (nn.Linear weight), b: (1,) f32 -> (N, 1) f32."""
    n = x.shape[0]

    # Lane-dense reshape.  Pad only to a whole number of 8x128 sublane rows;
    # the ragged last *grid block* is handled (masked) by Pallas itself.
    rows_needed = max(1, pl.cdiv(n, _LANES))
    rows = pl.cdiv(rows_needed, _SUBLANES) * _SUBLANES
    n_pad = rows * _LANES

    # tile_rows: always a multiple of 8 (round the user cap down), never larger
    # than the array, and -- for medium/large batches -- small enough that the
    # grid has >= 2 steps so v7x's two TensorCores both get work.
    cap = max(_SUBLANES, (max_tile_rows // _SUBLANES) * _SUBLANES)
    tile_rows = min(cap, rows)
    if rows >= 2 * _SUBLANES:
        half = pl.cdiv(rows // 2, _SUBLANES) * _SUBLANES
        tile_rows = min(tile_rows, max(_SUBLANES, half))

    grid = (pl.cdiv(rows, tile_rows),)

    x_flat = x.reshape(-1).astype(jnp.float32)
    x2d = jnp.pad(x_flat, (0, n_pad - n)).reshape(rows, _LANES)

    w_s = w.reshape(-1).astype(jnp.float32)   # (1,) scalar in SMEM
    b_s = b.reshape(-1).astype(jnp.float32)   # (1,) scalar in SMEM

    out2d = pl.pallas_call(
        _logreg_kernel,
        out_shape=jax.ShapeDtypeStruct((rows, _LANES), jnp.float32),
        grid=grid,
        in_specs=[
            pl.BlockSpec((tile_rows, _LANES), lambda i: (i, 0)),
            pl.BlockSpec(memory_space=pltpu.MemorySpace.SMEM),
            pl.BlockSpec(memory_space=pltpu.MemorySpace.SMEM),
        ],
        out_specs=pl.BlockSpec((tile_rows, _LANES), lambda i: (i, 0)),
        compiler_params=pltpu.CompilerParams(
            dimension_semantics=("parallel",),   # v7x: both TCs stream halves
            vmem_limit_bytes=_VMEM_LIMIT_BYTES,
        ),
        cost_estimate=pl.CostEstimate(
            flops=2 * n_pad,              # mul + add per element
            transcendentals=n_pad,        # one exp per element
            bytes_accessed=2 * n_pad * 4, # f32 read + f32 write
        ),
    )(x2d, w_s, b_s)

    # NOTE: padded lanes hold sigmoid(b); they are cropped here and must not be
    # reduced over before cropping.
    return out2d.reshape(-1)[:n].reshape(n, 1)


if __name__ == "__main__":
    # Same data as the PyTorch script: x = [1,5,10,10,25,50,70,75,100].view(-1,1)
    x = jnp.array([1, 5, 10, 10, 25, 50, 70, 75, 100],
                  dtype=jnp.float32).reshape(-1, 1)

    # Deterministic parameter init for nn.Linear(1, 1): uniform(-1, 1)
    # (bound = 1/sqrt(in_features) = 1).
    key = jax.random.PRNGKey(0)
    kw, kb, kx = jax.random.split(key, 3)
    w = jax.random.uniform(kw, (1, 1), jnp.float32, minval=-1.0, maxval=1.0)
    b = jax.random.uniform(kb, (1,), jnp.float32, minval=-1.0, maxval=1.0)

    # 1) Original toy batch (single tile, ragged 128-lane tail).
    out = logistic_regression_forward(x, w, b)
    jax.block_until_ready(out)
    ref = jax.nn.sigmoid(x @ w.T + b)
    assert out.shape == (9, 1)
    assert jnp.allclose(out, ref, atol=1e-6), (out, ref)

    # 2) Larger batch exercising padding + the multi-tile streaming grid
    #    (also passes a non-multiple-of-8 cap to exercise the rounding).
    x_big = jax.random.normal(kx, (2048, 1), jnp.float32) * 10.0
    out_big = logistic_regression_forward(x_big, w, b, max_tile_rows=12)
    jax.block_until_ready(out_big)
    ref_big = jax.nn.sigmoid(x_big @ w.T + b)
    assert out_big.shape == (2048, 1)
    assert jnp.allclose(out_big, ref_big, atol=1e-6), "large-batch mismatch"

    print("KERNEL_OK")
</pallas_src>

<mosaic_0001>
module attributes {stable_mosaic.version = 11 : i64} {
  func.func @_logreg_kernel(%arg0: i32, %arg1: memref<8x128xf32, #tpu.memory_space<vmem>>, %arg2: memref<1xf32, #tpu.memory_space<smem>>, %arg3: memref<1xf32, #tpu.memory_space<smem>>, %arg4: memref<8x128xf32, #tpu.memory_space<vmem>>) attributes {dimension_semantics = [#tpu.dimension_semantics<parallel>], iteration_bounds = array<i64: 1>, scalar_prefetch = 0 : i64, scratch_operands = 0 : i64, tpu.core_type = #tpu.core_type<tc>, window_params = [{transform_indices = @transform_0, window_bounds = array<i64: 8, 128>}, {transform_indices = @transform_1, window_bounds = array<i64: 1>}, {transform_indices = @transform_2, window_bounds = array<i64: 1>}, {transform_indices = @transform_3, window_bounds = array<i64: 8, 128>}]} {
    %c0 = arith.constant 0 : index
    %0 = memref.load %arg2[%c0] : memref<1xf32, #tpu.memory_space<smem>>
    %c0_0 = arith.constant 0 : index
    %1 = memref.load %arg3[%c0_0] : memref<1xf32, #tpu.memory_space<smem>>
    %c0_1 = arith.constant 0 : index
    %c0_2 = arith.constant 0 : index
    %2 = vector.load %arg1[%c0_1, %c0_2] : memref<8x128xf32, #tpu.memory_space<vmem>>, vector<8x128xf32>
    %3 = vector.broadcast %0 : f32 to vector<8x128xf32>
    %4 = arith.mulf %2, %3 : vector<8x128xf32>
    %5 = vector.broadcast %1 : f32 to vector<8x128xf32>
    %6 = arith.addf %4, %5 : vector<8x128xf32>
    %7 = arith.negf %6 : vector<8x128xf32>
    %8 = math.exp %7 : vector<8x128xf32>
    %cst = arith.constant 1.000000e+00 : f32
    %9 = vector.broadcast %cst : f32 to vector<8x128xf32>
    %10 = arith.addf %9, %8 : vector<8x128xf32>
    %11 = arith.divf %9, %10 : vector<8x128xf32>
    %c0_3 = arith.constant 0 : index
    %c0_4 = arith.constant 0 : index
    %12 = vector.load %arg4[%c0_3, %c0_4] : memref<8x128xf32, #tpu.memory_space<vmem>>, vector<8x128xf32>
    tpu.vector_store %arg4[%c0_3, %c0_4], %11 {strides = array<i32>} : memref<8x128xf32, #tpu.memory_space<vmem>>, vector<8x128xf32>,
    return
  }
  func.func @transform_0(%arg0: i32) -> (i32, i32) {
    %c0_i32 = arith.constant 0 : i32
    %c0_i32_0 = arith.constant 0 : i32
    return %arg0, %c0_i32 : i32, i32
  }
  func.func @transform_1(%arg0: i32) -> i32 {
    %c0_i32 = arith.constant 0 : i32
    %c0_i32_0 = arith.constant 0 : i32
    return %c0_i32 : i32
  }
  func.func @transform_2(%arg0: i32) -> i32 {
    %c0_i32 = arith.constant 0 : i32
    %c0_i32_0 = arith.constant 0 : i32
    return %c0_i32 : i32
  }
  func.func @transform_3(%arg0: i32) -> (i32, i32) {
    %c0_i32 = arith.constant 0 : i32
    %c0_i32_0 = arith.constant 0 : i32
    return %arg0, %c0_i32 : i32, i32
  }
}

</mosaic_0001>

<llo_original>
// kernel: tpu_custom_call.1
$region0: #{tpu_custom_call.1}
  #allocation0 [shape = 'u32[]', space=smem, size = 0x4, offset = 0x4, fixed_abs, tag = 'smem constant byte address 0x4 - core index']
  #allocation1 [shape = 'u32[144,128]{1,0:T(1,128)}', space=vmem, size = 0x12000, scoped, tag = 'internal scratch']
  #allocation2 [shape = 'f32[1]{0:T(128)S(6)}', space=smem, size = 0x200, scoped, tag = 'scoped memory for tpu_custom_call.1']
  #allocation3 [shape = 'f32[1]{0:T(128)S(6)}', space=smem, size = 0x200, scoped, tag = 'scoped memory for tpu_custom_call.1']
  %s0 = inlined_call_operand.hbm [shape: f32[8,128], index: 0, kind: input, shape index: {}]
  %s1 = inlined_call_operand.<no memory space> [shape: f32[1], index: 1, kind: input, shape index: {}]
  %s2 = inlined_call_operand.<no memory space> [shape: f32[1], index: 2, kind: input, shape index: {}]
  %s3 = inlined_call_operand.hbm [shape: f32[8,128], index: 3, kind: output, shape index: {}]
  %s4 = sld [smem:[#allocation0]]
  $region26: #{tpu_custom_call.1} parent=0
    _
  %s6 = ssub.s32 1, %s4
  %s7 = scalar_select 0, %s6, %s4
  %8 = sst [smem:[#allocation2]] %s1
  %9 = sst [smem:[#allocation3]] %s2
  $region1: #{tpu_custom_call.1} parent=0
    #allocation4 [shape = 'u8[4096]{0}', space=vmem, size = 0x1000, scoped, tag = 'input window, operand 0, single buffered']
    #allocation5 [shape = 's32[1]{0}', space=sflag, size = 0x4, scoped, tag = 'scoped memory for tpu_custom_call.1']
    #allocation6 [shape = 's32[1]{0}', space=sflag, size = 0x4, scoped, tag = 'scoped memory for tpu_custom_call.1']
    #allocation7 [shape = 'u8[4096]{0}', space=vmem, size = 0x1000, scoped, tag = 'output window, operand 0, single buffered']
    %10 = vsyncpa [#allocation5], 0
    %11 = vsyncpa [#allocation6], 0
    // Predicated region
    $region2: #{tpu_custom_call.1} parent=1 // pred_check
      _
    $region3: #{tpu_custom_call.1} parent=1 // pred_check_branch
      %13 = sbr.rel (0) target = $region5
    $region4: #{tpu_custom_call.1} parent=1 // pred_region
      %s15 = ssub.s32 128, 128
      %16 = vsyncadd [#allocation5], %s15
      %s18 = sshll.u32 [#allocation4], 4
      %s19 = int_to_ptr.vmem [resolvable:$true] %s18
      %21 = dma.hbm_to_vmem [thread:$0]  %s0, 128, %s19, [#allocation5]
    $region5: #{tpu_custom_call.1} parent=1 // pred_fallthru
      _
    // Predicated region
    $region6: #{tpu_custom_call.1} parent=1 // pred_check
      _
    $region7: #{tpu_custom_call.1} parent=1 // pred_check_branch
      %23 = sbr.rel (0) target = $region9
    $region8: #{tpu_custom_call.1} parent=1 // pred_region
      _
    $region9: #{tpu_custom_call.1} parent=1 // pred_fallthru
      _
    // Predicated region
    $region10: #{tpu_custom_call.1} parent=1 // pred_check
      _
    $region11: #{tpu_custom_call.1} parent=1 // pred_check_branch
      %25 = sbr.rel (0) target = $region13
    $region12: #{tpu_custom_call.1} parent=1 // pred_region
      _
    $region13: #{tpu_custom_call.1} parent=1 // pred_fallthru
      _
    // Predicated region
    $region14: #{tpu_custom_call.1} parent=1 // pred_check
      _
    $region15: #{tpu_custom_call.1} parent=1 // pred_check_branch
      %27 = sbr.rel (0) target = $region17
    $region16: #{tpu_custom_call.1} parent=1 // pred_region
      %28 = dma.done [#allocation5], 128
    $region17: #{tpu_custom_call.1} parent=1 // pred_fallthru
      _
    %s29 = sld [smem:[#allocation2]]
    %s30 = sld [smem:[#allocation3]]
    %v31 = vld [vmem:[#allocation4] sm:$0xff]
    %v32 = vstv %s29
    %v33 = vmul.f32 %v31, %v32
    %v34 = vstv %s30
    %v35 = vadd.f32 %v33, %v34
    %v36 = vxor.u32 %v35, 2147483648
    %v37 = vmul.f32 %v36, 1.442695
    %v38 = vpow.pop %v37
    %v39 = vadd.f32 %v38, 1.0
    %v40 = vrcp.pop %v39
    %v41 = vmul.f32 1.0, %v40
    %42 = vst [vmem:[#allocation7] sm:$0xff] %v41
    // Predicated region
    $region18: #{tpu_custom_call.1} parent=1 // pred_check
      _
    $region19: #{tpu_custom_call.1} parent=1 // pred_check_branch
      %44 = sbr.rel (0) target = $region21
    $region20: #{tpu_custom_call.1} parent=1 // pred_region
      %s46 = ssub.s32 128, 128
      %47 = vsyncadd [#allocation6], %s46
      %s49 = sshll.u32 [#allocation7], 4
      %s50 = int_to_ptr.vmem [resolvable:$true] %s49
      %52 = dma.vmem_to_hbm [thread:$0]  %s50, 128, %s3, [#allocation6]
    $region21: #{tpu_custom_call.1} parent=1 // pred_fallthru
      _
    // Predicated region
    $region22: #{tpu_custom_call.1} parent=1 // pred_check
      _
    $region23: #{tpu_custom_call.1} parent=1 // pred_check_branch
      %54 = sbr.rel (0) target = $region25
    $region24: #{tpu_custom_call.1} parent=1 // pred_region
      %55 = dma.done [#allocation6], 128
    $region25: #{tpu_custom_call.1} parent=1 // pred_fallthru
      _
    %56 = vsyncpa [#allocation5], 1
    %57 = vsyncpa [#allocation6], 1

</llo_original>
